<compile_context>
chip_gen: v7x
topology: tpu7x:2x2x1
jax: 0.10.0
libtpu: 0.0.40
codegen_flags: <defaults>
</compile_context>

<pallas_src>
import math
from functools import partial
from typing import Sequence

import jax
import jax.numpy as jnp
from jax.experimental import pallas as pl
from jax.experimental.pallas import tpu as pltpu


def _fused_mlp_kernel(*refs, num_layers: int, compute_dtype, precision):
    # refs = (x_ref, w0, b0, w1, b1, ..., o_ref)
    #   x_ref: (TM, B, D_in)
    #   wi   : (TM, d_out_i, d_in_i)   (PyTorch layout, unpadded)
    #   bi   : (TM, 1, d_out_i)
    #   o_ref: (TM, B, D_out)          (unpadded)
    x_ref = refs[0]
    o_ref = refs[-1]
    wb = refs[1:-1]

    h = x_ref[...].astype(compute_dtype)
    for i in range(num_layers):
        w = wb[2 * i][...].astype(compute_dtype)
        b = wb[2 * i + 1][...].astype(jnp.float32)
        # einsum('tbi,toi->tbo'): contract the last dims, batch over models.
        y = jax.lax.dot_general(
            h, w,
            dimension_numbers=(((2,), (2,)), ((0,), (0,))),
            preferred_element_type=jnp.float32,
            precision=precision,
        )
        y = y + b                                   # (TM,1,d_out) broadcasts over batch
        if i < num_layers - 1:
            h = jnp.maximum(y, 0.0).astype(compute_dtype)
        else:
            h = y
    o_ref[...] = h.astype(o_ref.dtype)


def _vmem_capacity_bytes() -> int:
    try:
        cap = getattr(pltpu.get_tpu_info(), "vmem_capacity_bytes", None)
        if cap:
            return int(cap)
    except Exception:
        pass
    return 64 * 1024 * 1024  # conservative fallback (v7x-sized per-core VMEM)


def convert_params_dtype(params, dtype):
    """One-time (outside the hot path) conversion of weights to `dtype`.

    Biases are left in f32; they are added in f32 inside the kernel anyway.
    """
    return [(w.astype(dtype), b) for (w, b) in params]


def multi_classifier_forward(x: jax.Array, params, *,
                             compute_dtype=jnp.bfloat16,
                             block_models: int | None = None) -> jax.Array:
    """Fused forward: flatten(2) -> [MultiLinear (+ReLU)]* -> MultiLinear.

    params: list of (weight (M, d_out, d_in), bias (M, d_out)).  No operand
    copies are made in the wrapper (only free reshapes); the kernel casts to
    `compute_dtype` in VMEM.  Pre-convert weights with convert_params_dtype()
    once (outside the hot loop) to also halve the HBM weight stream.
    """
    M, B = x.shape[0], x.shape[1]
    h = x.reshape(M, B, -1)                # free reshape of contiguous input
    D_in = h.shape[-1]
    num_layers = len(params)
    D_out = params[-1][0].shape[1]
    assert params[0][0].shape[2] == D_in, "first-layer d_in must match flattened input"

    out_dtype = x.dtype
    cd_bytes = jnp.dtype(compute_dtype).itemsize

    # VMEM footprint per model per grid step: double-buffered tiles plus
    # in-kernel temporaries (cast copies of h/w and the f32 dot outputs).
    def per_model_bytes() -> int:
        n = 2 * B * D_in * x.dtype.itemsize                 # x tile (x2 buffers)
        n += 2 * B * D_out * jnp.dtype(out_dtype).itemsize  # output tile (x2)
        n += B * D_in * cd_bytes                            # in-kernel h cast
        d_in = D_in
        for w, b in params:
            d_out = w.shape[1]
            n += 2 * d_out * d_in * w.dtype.itemsize        # weight tile (x2)
            n += 2 * d_out * b.dtype.itemsize               # bias tile (x2)
            n += d_out * d_in * cd_bytes                    # in-kernel w cast
            n += B * d_out * 4                              # f32 dot output
            n += B * d_out * cd_bytes                       # next-layer h cast
            d_in = d_out
        return n

    vmem_cap = _vmem_capacity_bytes()
    per_model = max(1, per_model_bytes())
    if block_models is None:
        budget = int(0.40 * vmem_cap)      # keep working set well under VMEM
        tm = max(1, budget // per_model)
    else:
        tm = block_models
    # Ensure >= 2 grid steps when possible so the "parallel" model axis can
    # shard across both TensorCores on v7x (negligible cost on 1-TC chips).
    if M >= 2:
        tm = min(tm, (M + 1) // 2)
    tm = max(1, min(tm, M))

    # Partial last block is allowed: padded model slots compute on garbage
    # reads, but there is no cross-model reduction and their output writes are
    # masked, so results for real models are unaffected.
    grid = (pl.cdiv(M, tm),)

    vmem_limit = int(min(0.8 * vmem_cap,
                         max(3 * tm * per_model + (4 << 20), 32 << 20)))

    precision = (jax.lax.Precision.HIGHEST
                 if jnp.dtype(compute_dtype) == jnp.dtype(jnp.float32)
                 else jax.lax.Precision.DEFAULT)

    operands = [h]
    in_specs = [pl.BlockSpec((tm, B, D_in), lambda m: (m, 0, 0))]
    for w, b in params:
        d_out, d_in_l = w.shape[1], w.shape[2]
        operands.append(w)                                   # no cast, no pad
        in_specs.append(pl.BlockSpec((tm, d_out, d_in_l), lambda m: (m, 0, 0)))
        operands.append(b.reshape(b.shape[0], 1, d_out))     # free unit-dim reshape
        in_specs.append(pl.BlockSpec((tm, 1, d_out), lambda m: (m, 0, 0)))

    return pl.pallas_call(
        partial(_fused_mlp_kernel, num_layers=num_layers,
                compute_dtype=compute_dtype, precision=precision),
        out_shape=jax.ShapeDtypeStruct((M, B, D_out), out_dtype),
        grid=grid,
        in_specs=in_specs,
        out_specs=pl.BlockSpec((tm, B, D_out), lambda m: (m, 0, 0)),
        compiler_params=pltpu.CompilerParams(
            dimension_semantics=("parallel",),   # model axis is independent
            vmem_limit_bytes=vmem_limit,
        ),
    )(*operands)


def init_multi_classifier_params(key, n_models: int, sizes: Sequence[int]):
    """Matches MultiLinear.__init__: weight ~ N(0, 1/sqrt(d_in)), bias = 0."""
    params = []
    for d_in, d_out in zip(sizes, sizes[1:]):
        key, wk = jax.random.split(key)
        w = jax.random.normal(wk, (n_models, d_out, d_in), jnp.float32) / math.sqrt(d_in)
        b = jnp.zeros((n_models, d_out), jnp.float32)
        params.append((w, b))
    return params


def _reference_forward(x, params):
    M, B = x.shape[0], x.shape[1]
    h = x.reshape(M, B, -1)
    n_layers = len(params)
    for i, (w, b) in enumerate(params):
        h = jnp.einsum("moi,mbi->mbo", w, h,
                       precision=jax.lax.Precision.HIGHEST) + b[:, None, :]
        if i < n_layers - 1:
            h = jnp.maximum(h, 0.0)
    return h


# TODO(synk): MultiClassifier.get_reindexed / MultiLinear.get_reindexed are
# host-side parameter re-indexing (params[idx]) and have no kernel equivalent;
# intentionally not ported.

if __name__ == "__main__":
    n_models = 2
    batch = 8
    H = W = 16
    sizes = (H * W, 32, 10)

    key = jax.random.PRNGKey(0)
    key, xk = jax.random.split(key)
    x = jax.random.normal(xk, (n_models, batch, H, W), jnp.float32)
    params = init_multi_classifier_params(key, n_models, sizes)

    ref = _reference_forward(x, params)

    # Exact-semantics path: f32 operands, Precision.HIGHEST matmuls (matches
    # the einsum reference, which also uses HIGHEST).
    out_f32 = jax.block_until_ready(
        multi_classifier_forward(x, params, compute_dtype=jnp.float32))
    assert out_f32.shape == (n_models, batch, sizes[-1]), out_f32.shape
    assert jnp.allclose(out_f32, ref, atol=1e-3, rtol=1e-3), "f32 mismatch vs reference"

    # Fast path: weights pre-converted to bf16 ONCE (outside the hot path);
    # f32 accumulation inside the kernel.
    params_bf16 = convert_params_dtype(params, jnp.bfloat16)
    out_bf16 = jax.block_until_ready(
        multi_classifier_forward(x, params_bf16, compute_dtype=jnp.bfloat16))
    assert out_bf16.shape == (n_models, batch, sizes[-1]), out_bf16.shape
    assert jnp.allclose(out_bf16, ref, atol=1e-1, rtol=1e-1), "bf16 mismatch vs reference"

    print("KERNEL_OK")
</pallas_src>

<mosaic_0001>
module attributes {stable_mosaic.version = 11 : i64} {
  func.func @_fused_mlp_kernel(%arg0: i32, %arg1: memref<1x8x256xf32, #tpu.memory_space<vmem>>, %arg2: memref<1x32x256xf32, #tpu.memory_space<vmem>>, %arg3: memref<1x1x32xf32, #tpu.memory_space<vmem>>, %arg4: memref<1x10x32xf32, #tpu.memory_space<vmem>>, %arg5: memref<1x1x10xf32, #tpu.memory_space<vmem>>, %arg6: memref<1x8x10xf32, #tpu.memory_space<vmem>>) attributes {dimension_semantics = [#tpu.dimension_semantics<parallel>], iteration_bounds = array<i64: 2>, scalar_prefetch = 0 : i64, scratch_operands = 0 : i64, tpu.core_type = #tpu.core_type<tc>, window_params = [{transform_indices = @transform_0, window_bounds = array<i64: 1, 8, 256>}, {transform_indices = @transform_1, window_bounds = array<i64: 1, 32, 256>}, {transform_indices = @transform_2, window_bounds = array<i64: 1, 1, 32>}, {transform_indices = @transform_3, window_bounds = array<i64: 1, 10, 32>}, {transform_indices = @transform_4, window_bounds = array<i64: 1, 1, 10>}, {transform_indices = @transform_5, window_bounds = array<i64: 1, 8, 10>}]} {
    %c0 = arith.constant 0 : index
    %c0_0 = arith.constant 0 : index
    %c0_1 = arith.constant 0 : index
    %0 = vector.load %arg1[%c0, %c0_0, %c0_1] : memref<1x8x256xf32, #tpu.memory_space<vmem>>, vector<1x8x256xf32>
    %c0_2 = arith.constant 0 : index
    %c0_3 = arith.constant 0 : index
    %c0_4 = arith.constant 0 : index
    %1 = vector.load %arg2[%c0_2, %c0_3, %c0_4] : memref<1x32x256xf32, #tpu.memory_space<vmem>>, vector<1x32x256xf32>
    %c0_5 = arith.constant 0 : index
    %c0_6 = arith.constant 0 : index
    %c0_7 = arith.constant 0 : index
    %2 = vector.load %arg3[%c0_5, %c0_6, %c0_7] : memref<1x1x32xf32, #tpu.memory_space<vmem>>, vector<1x1x32xf32>
    %cst = arith.constant dense<0.000000e+00> : vector<1x8x32xf32>
    %3 = tpu.matmul %0, %1, %cst {dimension_numbers = #tpu.dot_dimension_numbers<[2], [2], [1], [1], [0, 0, 0, 1, 1, 1], [0], [0]>, precision = #tpu.contract_precision<fp32>} : vector<1x8x256xf32>, vector<1x32x256xf32>, vector<1x8x32xf32> -> vector<1x8x32xf32>
    %4 = vector.broadcast %2 : vector<1x1x32xf32> to vector<1x8x32xf32>
    %5 = arith.addf %3, %4 : vector<1x8x32xf32>
    %cst_8 = arith.constant 0.000000e+00 : f32
    %6 = vector.broadcast %cst_8 : f32 to vector<1x8x32xf32>
    %7 = arith.maximumf %5, %6 : vector<1x8x32xf32>
    %c0_9 = arith.constant 0 : index
    %c0_10 = arith.constant 0 : index
    %c0_11 = arith.constant 0 : index
    %8 = vector.load %arg4[%c0_9, %c0_10, %c0_11] : memref<1x10x32xf32, #tpu.memory_space<vmem>>, vector<1x10x32xf32>
    %c0_12 = arith.constant 0 : index
    %c0_13 = arith.constant 0 : index
    %c0_14 = arith.constant 0 : index
    %9 = vector.load %arg5[%c0_12, %c0_13, %c0_14] : memref<1x1x10xf32, #tpu.memory_space<vmem>>, vector<1x1x10xf32>
    %cst_15 = arith.constant dense<0.000000e+00> : vector<1x8x10xf32>
    %10 = tpu.matmul %7, %8, %cst_15 {dimension_numbers = #tpu.dot_dimension_numbers<[2], [2], [1], [1], [0, 0, 0, 1, 1, 1], [0], [0]>, precision = #tpu.contract_precision<fp32>} : vector<1x8x32xf32>, vector<1x10x32xf32>, vector<1x8x10xf32> -> vector<1x8x10xf32>
    %11 = vector.broadcast %9 : vector<1x1x10xf32> to vector<1x8x10xf32>
    %12 = arith.addf %10, %11 : vector<1x8x10xf32>
    %c0_16 = arith.constant 0 : index
    %c0_17 = arith.constant 0 : index
    %c0_18 = arith.constant 0 : index
    %13 = vector.load %arg6[%c0_16, %c0_17, %c0_18] : memref<1x8x10xf32, #tpu.memory_space<vmem>>, vector<1x8x10xf32>
    tpu.vector_store %arg6[%c0_16, %c0_17, %c0_18], %12 {strides = array<i32>} : memref<1x8x10xf32, #tpu.memory_space<vmem>>, vector<1x8x10xf32>,
    return
  }
  func.func @transform_0(%arg0: i32) -> (i32, i32, i32) {
    %c0_i32 = arith.constant 0 : i32
    %c0_i32_0 = arith.constant 0 : i32
    %c0_i32_1 = arith.constant 0 : i32
    return %arg0, %c0_i32, %c0_i32_0 : i32, i32, i32
  }
  func.func @transform_1(%arg0: i32) -> (i32, i32, i32) {
    %c0_i32 = arith.constant 0 : i32
    %c0_i32_0 = arith.constant 0 : i32
    %c0_i32_1 = arith.constant 0 : i32
    return %arg0, %c0_i32, %c0_i32_0 : i32, i32, i32
  }
  func.func @transform_2(%arg0: i32) -> (i32, i32, i32) {
    %c0_i32 = arith.constant 0 : i32
    %c0_i32_0 = arith.constant 0 : i32
    %c0_i32_1 = arith.constant 0 : i32
    return %arg0, %c0_i32, %c0_i32_0 : i32, i32, i32
  }
  func.func @transform_3(%arg0: i32) -> (i32, i32, i32) {
    %c0_i32 = arith.constant 0 : i32
    %c0_i32_0 = arith.constant 0 : i32
    %c0_i32_1 = arith.constant 0 : i32
    return %arg0, %c0_i32, %c0_i32_0 : i32, i32, i32
  }
  func.func @transform_4(%arg0: i32) -> (i32, i32, i32) {
    %c0_i32 = arith.constant 0 : i32
    %c0_i32_0 = arith.constant 0 : i32
    %c0_i32_1 = arith.constant 0 : i32
    return %arg0, %c0_i32, %c0_i32_0 : i32, i32, i32
  }
  func.func @transform_5(%arg0: i32) -> (i32, i32, i32) {
    %c0_i32 = arith.constant 0 : i32
    %c0_i32_0 = arith.constant 0 : i32
    %c0_i32_1 = arith.constant 0 : i32
    return %arg0, %c0_i32, %c0_i32_0 : i32, i32, i32
  }
}

</mosaic_0001>

<llo_original>
// kernel: tpu_custom_call.1
$region0: #{tpu_custom_call.1}
  #allocation0 [shape = 'u32[]', space=smem, size = 0x4, offset = 0x4, fixed_abs, tag = 'smem constant byte address 0x4 - core index']
  #allocation1 [shape = 'u32[144,128]{1,0:T(1,128)}', space=vmem, size = 0x12000, scoped, tag = 'internal scratch']
  %s0 = inlined_call_operand.vmem [shape: f32[2,8,256], index: 0, kind: input, shape index: {}]
  %s1 = inlined_call_operand.hbm [shape: f32[2,32,256], index: 1, kind: input, shape index: {}]
  %s2 = inlined_call_operand.vmem [shape: f32[2,1,32], index: 2, kind: input, shape index: {}]
  %s3 = inlined_call_operand.vmem [shape: f32[2,10,32], index: 3, kind: input, shape index: {}]
  %s4 = inlined_call_operand.vmem [shape: f32[2,1,10], index: 4, kind: input, shape index: {}]
  %s5 = inlined_call_operand.hbm [shape: f32[2,8,10], index: 5, kind: output, shape index: {}]
  %s6 = sld [smem:[#allocation0]]
  $region57: #{tpu_custom_call.1} parent=0
    _
  %s8 = ssub.s32 1, %s6
  %s9 = scalar_select 0, %s8, %s6
  $region1: #{tpu_custom_call.1} parent=0
    #allocation2 [shape = 'u8[65536]{0}', space=vmem, size = 0x10000, scoped, tag = 'input window, operand 1']
    #allocation3 [shape = 's32[2]{0}', space=sflag, size = 0x8, scoped, tag = 'scoped memory for tpu_custom_call.1']
    #allocation4 [shape = 's32[2]{0}', space=sflag, size = 0x8, scoped, tag = 'scoped memory for tpu_custom_call.1']
    #allocation5 [shape = 'u8[8192]{0}', space=vmem, size = 0x2000, scoped, tag = 'output window, operand 0']
    %10 = vsyncpa [#allocation3], 0
    %s11 = scalar_lea.sflag [#allocation3], 1
    %12 = vsyncpa %s11, 0
    %13 = vsyncpa [#allocation4], 0
    %s14 = scalar_lea.sflag [#allocation4], 1
    %15 = vsyncpa %s14, 0
    loop: start=0, step=1, limit=4
    $region2: #{tpu_custom_call.1} parent=1 // loop_pre_header
      _
    $region3: #{tpu_custom_call.1} parent=1 // loop_header
      %s17 = sphi 0, %s21
      %p18 = scmp.ge.s32.totalorder %s17, 4
      %s27 = sphi 0, %s29
      %s30 = sphi 0, %s27
      %s31 = sphi 0, %s30
      %s47 = sphi 0, %s31
      %s53 = sphi 0, %s55
      %s56 = sphi 0, %s53
      %s57 = sphi 0, %s56
      %s73 = sphi 0, %s57
      %s79 = sphi 0, %s81
      %s82 = sphi 0, %s79
      %s83 = sphi 0, %s82
      %s99 = sphi 0, %s83
      %s105 = sphi 0, %s107
      %s108 = sphi 0, %s105
      %s109 = sphi 0, %s108
      %s125 = sphi 0, %s109
      %s131 = sphi 0, %s133
      %s134 = sphi 0, %s131
      %s135 = sphi 0, %s134
      %s151 = sphi 0, %s135
      %s157 = sphi 0, %s159
      %s160 = sphi 0, %s157
      %s161 = sphi 0, %s160
      %s177 = sphi 0, %s161
    $region4: #{tpu_custom_call.1} parent=1 // loop_header_branch
      %20 = sbr.rel (%p18) target = $region8
    $region5: #{tpu_custom_call.1} parent=1 // loop_body
      %s22 = ssub.s32 %s17, 1
      %s23 = ssub.s32 %s17, 2
      %s24 = sadd.s32 %s17, 1
      %s25 = ssub.s32 %s17, %s24
      %p26 = scmp.eq.s32.totalorder %s25, 0
      %s28 = sadd.s32 %s27, 1
      %s29 = scalar_select %p26, %s27, %s28
      %p32 = pneg %p26
      %p33 = scmp.eq.s32.totalorder %s17, 1
      %p34 = por %p32, %p33
      %p35 = scmp.ne.s32.totalorder %s27, %s30
      %p36 = scmp.eq.s32.totalorder %s17, 0
      %p37 = por %p35, %p36
      %p38 = scmp.ne.s32.totalorder %s27, %s30
      %p39 = scmp.eq.s32.totalorder %s22, 1
      %p40 = por %p38, %p39
      %p41 = scmp.ne.s32.totalorder %s30, %s31
      %p42 = scmp.eq.s32.totalorder %s22, 0
      %p43 = por %p41, %p42
      %p44 = scmp.ne.s32.totalorder %s30, %s31
      %p45 = scmp.eq.s32.totalorder %s23, 1
      %p46 = por %p44, %p45
      %p48 = scmp.ne.s32.totalorder %s31, %s47
      %p49 = scmp.eq.s32.totalorder %s23, 0
      %p50 = por %p48, %p49
      %s51 = ssub.s32 %s17, %s24
      %p52 = scmp.eq.s32.totalorder %s51, 0
      %s54 = sadd.s32 %s53, 1
      %s55 = scalar_select %p52, %s53, %s54
      %p58 = pneg %p52
      %p59 = scmp.eq.s32.totalorder %s17, 1
      %p60 = por %p58, %p59
      %p61 = scmp.ne.s32.totalorder %s53, %s56
      %p62 = scmp.eq.s32.totalorder %s17, 0
      %p63 = por %p61, %p62
      %p64 = scmp.ne.s32.totalorder %s53, %s56
      %p65 = scmp.eq.s32.totalorder %s22, 1
      %p66 = por %p64, %p65
      %p67 = scmp.ne.s32.totalorder %s56, %s57
      %p68 = scmp.eq.s32.totalorder %s22, 0
      %p69 = por %p67, %p68
      %p70 = scmp.ne.s32.totalorder %s56, %s57
      %p71 = scmp.eq.s32.totalorder %s23, 1
      %p72 = por %p70, %p71
      %p74 = scmp.ne.s32.totalorder %s57, %s73
      %p75 = scmp.eq.s32.totalorder %s23, 0
      %p76 = por %p74, %p75
      %s77 = ssub.s32 %s17, %s24
      %p78 = scmp.eq.s32.totalorder %s77, 0
      %s80 = sadd.s32 %s79, 1
      %s81 = scalar_select %p78, %s79, %s80
      %p84 = pneg %p78
      %p85 = scmp.eq.s32.totalorder %s17, 1
      %p86 = por %p84, %p85
      %p87 = scmp.ne.s32.totalorder %s79, %s82
      %p88 = scmp.eq.s32.totalorder %s17, 0
      %p89 = por %p87, %p88
      %p90 = scmp.ne.s32.totalorder %s79, %s82
      %p91 = scmp.eq.s32.totalorder %s22, 1
      %p92 = por %p90, %p91
      %p93 = scmp.ne.s32.totalorder %s82, %s83
      %p94 = scmp.eq.s32.totalorder %s22, 0
      %p95 = por %p93, %p94
      %p96 = scmp.ne.s32.totalorder %s82, %s83
      %p97 = scmp.eq.s32.totalorder %s23, 1
      %p98 = por %p96, %p97
      %p100 = scmp.ne.s32.totalorder %s83, %s99
      %p101 = scmp.eq.s32.totalorder %s23, 0
      %p102 = por %p100, %p101
      %s103 = ssub.s32 %s17, %s24
      %p104 = scmp.eq.s32.totalorder %s103, 0
      %s106 = sadd.s32 %s105, 1
      %s107 = scalar_select %p104, %s105, %s106
      %p110 = pneg %p104
      %p111 = scmp.eq.s32.totalorder %s17, 1
      %p112 = por %p110, %p111
      %p113 = scmp.ne.s32.totalorder %s105, %s108
      %p114 = scmp.eq.s32.totalorder %s17, 0
      %p115 = por %p113, %p114
      %p116 = scmp.ne.s32.totalorder %s105, %s108
      %p117 = scmp.eq.s32.totalorder %s22, 1
      %p118 = por %p116, %p117
      %p119 = scmp.ne.s32.totalorder %s108, %s109
      %p120 = scmp.eq.s32.totalorder %s22, 0
      %p121 = por %p119, %p120
      %p122 = scmp.ne.s32.totalorder %s108, %s109
      %p123 = scmp.eq.s32.totalorder %s23, 1
      %p124 = por %p122, %p123
      %p126 = scmp.ne.s32.totalorder %s109, %s125
      %p127 = scmp.eq.s32.totalorder %s23, 0
      %p128 = por %p126, %p127
      %s129 = ssub.s32 %s17, %s24
      %p130 = scmp.eq.s32.totalorder %s129, 0
      %s132 = sadd.s32 %s131, 1
      %s133 = scalar_select %p130, %s131, %s132
      %p136 = pneg %p130
      %p137 = scmp.eq.s32.totalorder %s17, 1
      %p138 = por %p136, %p137
      %p139 = scmp.ne.s32.totalorder %s131, %s134
      %p140 = scmp.eq.s32.totalorder %s17, 0
      %p141 = por %p139, %p140
      %p142 = scmp.ne.s32.totalorder %s131, %s134
      %p143 = scmp.eq.s32.totalorder %s22, 1
      %p144 = por %p142, %p143
      %p145 = scmp.ne.s32.totalorder %s134, %s135
      %p146 = scmp.eq.s32.totalorder %s22, 0
      %p147 = por %p145, %p146
      %p148 = scmp.ne.s32.totalorder %s134, %s135
      %p149 = scmp.eq.s32.totalorder %s23, 1
      %p150 = por %p148, %p149
      %p152 = scmp.ne.s32.totalorder %s135, %s151
      %p153 = scmp.eq.s32.totalorder %s23, 0
      %p154 = por %p152, %p153
      %s155 = ssub.s32 %s17, %s24
      %p156 = scmp.eq.s32.totalorder %s155, 0
      %s158 = sadd.s32 %s157, 1
      %s159 = scalar_select %p156, %s157, %s158
      %p162 = pneg %p156
      %p163 = scmp.eq.s32.totalorder %s17, 1
      %p164 = por %p162, %p163
      %p165 = scmp.ne.s32.totalorder %s157, %s160
      %p166 = scmp.eq.s32.totalorder %s17, 0
      %p167 = por %p165, %p166
      %p168 = scmp.ne.s32.totalorder %s157, %s160
      %p169 = scmp.eq.s32.totalorder %s22, 1
      %p170 = por %p168, %p169
      %p171 = scmp.ne.s32.totalorder %s160, %s161
      %p172 = scmp.eq.s32.totalorder %s22, 0
      %p173 = por %p171, %p172
      %p174 = scmp.ne.s32.totalorder %s160, %s161
      %p175 = scmp.eq.s32.totalorder %s23, 1
      %p176 = por %p174, %p175
      %p178 = scmp.ne.s32.totalorder %s161, %s177
      %p179 = scmp.eq.s32.totalorder %s23, 0
      %p180 = por %p178, %p179
      %p181 = scmp.le.s32.totalorder 1, %s17
      %p182 = scmp.lt.s32.totalorder %s17, 3
      %p183 = pnand %p181, %p182
      %p184 = pneg %p183
      // Predicated region
      $region9: #{tpu_custom_call.1} parent=5 // pred_check
        _
      $region10: #{tpu_custom_call.1} parent=5 // pred_check_branch
        %186 = sbr.rel (%p183) target = $region12
      $region11: #{tpu_custom_call.1} parent=5 // pred_region
        %s187 = ssub.s32 %s17, 1
      $region12: #{tpu_custom_call.1} parent=5 // pred_fallthru
        _
      %p188 = scmp.lt.s32.totalorder %s17, 2
      // Predicated region
      $region13: #{tpu_custom_call.1} parent=5 // pred_check
        %p189 = pneg %p188
      $region14: #{tpu_custom_call.1} parent=5 // pred_check_branch
        %191 = sbr.rel (%p189) target = $region16
      $region15: #{tpu_custom_call.1} parent=5 // pred_region
        // Predicated region
        $region17: #{tpu_custom_call.1} parent=15 // pred_check
          %p192 = pneg %p37
        $region18: #{tpu_custom_call.1} parent=15 // pred_check_branch
          %194 = sbr.rel (%p192) target = $region20
        $region19: #{tpu_custom_call.1} parent=15 // pred_region
          %p195 = scmp.lt.s32.totalorder %s17, 1
          %s196 = scalar_select %p195, %s17, 1
          %s197 = smul.addr %s196, 2
          %s198 = smul.addr %s197, 8
          %s199 = scalar_lea.vmem %s0, %s198
        $region20: #{tpu_custom_call.1} parent=15 // pred_fallthru
          _
        // Predicated region
        $region21: #{tpu_custom_call.1} parent=15 // pred_check
          %p200 = pneg %p63
        $region22: #{tpu_custom_call.1} parent=15 // pred_check_branch
          %202 = sbr.rel (%p200) target = $region24
        $region23: #{tpu_custom_call.1} parent=15 // pred_region
          %s203 = sand.u32 %s53, 1
          %s204 = scalar_lea.sflag [#allocation3], %s203
          %s205 = sand.u32 %s53, 1
          %s206 = smul.addr %s205, 64
          %s207 = scalar_lea.vmem [#allocation2], %s206
          %s209 = ssub.s32 1024, 1024
          %210 = vsyncadd %s204, %s209
          %s211 = smul.addr %s17, 8
          %s212 = smul.addr %s211, 128
          %s213 = scalar_lea.hbm %s1, %s212
          %s214 = sshll.u32 %s207, 4
          %s215 = int_to_ptr.vmem [resolvable:$true] %s214
          %220 = dma.hbm_to_vmem [thread:$0]  %s213, 1024, %s215, %s204, 256, 256, 16
        $region24: #{tpu_custom_call.1} parent=15 // pred_fallthru
          _
        // Predicated region
        $region25: #{tpu_custom_call.1} parent=15 // pred_check
          %p221 = pneg %p89
        $region26: #{tpu_custom_call.1} parent=15 // pred_check_branch
          %223 = sbr.rel (%p221) target = $region28
        $region27: #{tpu_custom_call.1} parent=15 // pred_region
          %p224 = scmp.lt.s32.totalorder %s17, 1
          %s225 = scalar_select %p224, %s17, 1
          %s226 = scalar_lea.vmem %s2, %s225
        $region28: #{tpu_custom_call.1} parent=15 // pred_fallthru
          _
        // Predicated region
        $region29: #{tpu_custom_call.1} parent=15 // pred_check
          %p227 = pneg %p115
        $region30: #{tpu_custom_call.1} parent=15 // pred_check_branch
          %229 = sbr.rel (%p227) target = $region32
        $region31: #{tpu_custom_call.1} parent=15 // pred_region
          %p230 = scmp.lt.s32.totalorder %s17, 1
          %s231 = scalar_select %p230, %s17, 1
          %s232 = smul.addr %s231, 2
          %s233 = smul.addr %s232, 8
          %s234 = scalar_lea.vmem %s3, %s233
        $region32: #{tpu_custom_call.1} parent=15 // pred_fallthru
          _
        // Predicated region
        $region33: #{tpu_custom_call.1} parent=15 // pred_check
          %p235 = pneg %p141
        $region34: #{tpu_custom_call.1} parent=15 // pred_check_branch
          %237 = sbr.rel (%p235) target = $region36
        $region35: #{tpu_custom_call.1} parent=15 // pred_region
          %p238 = scmp.lt.s32.totalorder %s17, 1
          %s239 = scalar_select %p238, %s17, 1
          %s240 = scalar_lea.vmem %s4, %s239
        $region36: #{tpu_custom_call.1} parent=15 // pred_fallthru
          _
      $region16: #{tpu_custom_call.1} parent=5 // pred_fallthru
        _
      %p241 = scmp.le.s32.totalorder 1, %s17
      %p242 = scmp.lt.s32.totalorder %s17, 3
      %p243 = pnand %p241, %p242
      %p244 = pneg %p243
      // Predicated region
      $region37: #{tpu_custom_call.1} parent=5 // pred_check
        _
      $region38: #{tpu_custom_call.1} parent=5 // pred_check_branch
        %246 = sbr.rel (%p243) target = $region40
      $region39: #{tpu_custom_call.1} parent=5 // pred_region
        %s247 = ssub.s32 %s17, 1
        %s248 = sand.u32 %s56, 1
        %s249 = scalar_lea.sflag [#allocation3], %s248
        %s250 = sand.u32 %s56, 1
        %s251 = smul.addr %s250, 64
        %s252 = scalar_lea.vmem [#allocation2], %s251
        // Predicated region
        $region41: #{tpu_custom_call.1} parent=39 // pred_check
          %p253 = pneg %p69
        $region42: #{tpu_custom_call.1} parent=39 // pred_check_branch
          %255 = sbr.rel (%p253) target = $region44
        $region43: #{tpu_custom_call.1} parent=39 // pred_region
          %256 = dma.done %s249, 1024
        $region44: #{tpu_custom_call.1} parent=39 // pred_fallthru
          _
        %p257 = scmp.lt.s32.totalorder %s22, 1
        %s258 = scalar_select %p257, %s22, 1
        %s259 = smul.addr %s258, 2
        %s260 = smul.addr %s259, 8
        %s261 = scalar_lea.vmem %s0, %s260
        %p262 = pneg %p43
        %p263 = pneg %p40
        %s264 = sand.u32 %s56, 1
        %s265 = scalar_lea.sflag [#allocation3], %s264
        %s266 = sand.u32 %s56, 1
        %s267 = smul.addr %s266, 64
        %s268 = scalar_lea.vmem [#allocation2], %s267
        %p269 = pneg %p69
        %p270 = pneg %p66
        %p271 = scmp.lt.s32.totalorder %s22, 1
        %s272 = scalar_select %p271, %s22, 1
        %s273 = scalar_lea.vmem %s2, %s272
        %p274 = pneg %p95
        %p275 = pneg %p92
        %p276 = scmp.lt.s32.totalorder %s22, 1
        %s277 = scalar_select %p276, %s22, 1
        %s278 = smul.addr %s277, 2
        %s279 = smul.addr %s278, 8
        %s280 = scalar_lea.vmem %s3, %s279
        %p281 = pneg %p121
        %p282 = pneg %p118
        %p283 = scmp.lt.s32.totalorder %s22, 1
        %s284 = scalar_select %p283, %s22, 1
        %s285 = scalar_lea.vmem %s4, %s284
        %p286 = pneg %p147
        %p287 = pneg %p144
        %p288 = pneg %p173
        %p289 = pneg %p170
        %s290 = sand.u32 %s160, 1
        %s291 = scalar_lea.sflag [#allocation4], %s290
        %s292 = sand.u32 %s160, 1
        %s293 = smul.addr %s292, 8
        %s294 = scalar_lea.vmem [#allocation5], %s293
        %p295 = scmp.lt.s32.totalorder %s22, 1
        %s296 = scalar_select %p295, %s22, 1
        %s297 = smul.addr %s296, 2
        %s298 = smul.addr %s297, 8
        %s299 = scalar_lea.vmem %s0, %s298
        %p300 = scmp.lt.s32.totalorder %s22, 1
        %s301 = scalar_select %p300, %s22, 1
        %s302 = scalar_lea.vmem %s2, %s301
        %p303 = scmp.lt.s32.totalorder %s22, 1
        %s304 = scalar_select %p303, %s22, 1
        %s305 = smul.addr %s304, 2
        %s306 = smul.addr %s305, 8
        %s307 = scalar_lea.vmem %s3, %s306
        %p308 = scmp.lt.s32.totalorder %s22, 1
        %s309 = scalar_select %p308, %s22, 1
        %s310 = scalar_lea.vmem %s4, %s309
        %v311 = vld [vmem:[%s299] sm:$0xff]
        %v312 = vld [vmem:[%s299 + $0x8] sm:$0xff]
        %v313 = vld [vmem:[%s252] sm:$0xff]
        %v314 = vld [vmem:[%s252 + $0x8] sm:$0xff]
        %v315 = vld [vmem:[%s252 + $0x10] sm:$0xff]
        %v316 = vld [vmem:[%s252 + $0x18] sm:$0xff]
        %v317 = vld [vmem:[%s252 + $0x20] sm:$0xff]
        %v318 = vld [vmem:[%s252 + $0x28] sm:$0xff]
        %v319 = vld [vmem:[%s252 + $0x30] sm:$0xff]
        %v320 = vld [vmem:[%s252 + $0x38] sm:$0xff]
        %v321 = vld [vmem:[%s302] sm:$0x1]
        %v323 = vlaneseq
        %v324 = vshrl.u32 %v323, 7
        %v325 = vsub.s32 0, %v324
        %v326 = vrot.slane %v321, %v325
        %v328 = vand.u32 %v314, 4294901760
        %329 = vmatprep.subr.mxu0 %v328
        %v330 = vand.u32 %v313, 4294901760
        %331 = vmatpush1.xpose.msra.mxu0 %v330
        %v332 = vand.u32 %v316, 4294901760
        %333 = vmatprep.subr.mxu0 %v332
        %v334 = vand.u32 %v315, 4294901760
        %335 = vmatpush1.xpose.msra.mxu0 %v334
        %v336 = vand.u32 %v318, 4294901760
        %337 = vmatprep.subr.mxu0 %v336
        %v338 = vand.u32 %v317, 4294901760
        %339 = vmatpush1.xpose.msra.mxu0 %v338
        %v340 = vand.u32 %v320, 4294901760
        %341 = vmatprep.subr.mxu0 %v340
        %v342 = vand.u32 %v319, 4294901760
        %343 = vmatpush1.xpose.msra.mxu0 %v342
        %344 = vmatprep.subr.mxu0 0.0
        %345 = vmatpush1.xpose.msra.mxu0 0.0
        %346 = vmatprep.subr.mxu0 0.0
        %347 = vmatpush1.xpose.msra.mxu0 0.0
        %348 = vmatprep.subr.mxu0 0.0
        %349 = vmatpush1.xpose.msra.mxu0 0.0
        %350 = vmatprep.subr.mxu0 0.0
        %351 = vmatpush1.xpose.msra.mxu0 0.0
        %352 = vmatprep.subr.mxu0 0.0
        %353 = vmatpush1.xpose.msra.mxu0 0.0
        %354 = vmatprep.subr.mxu0 0.0
        %355 = vmatpush1.xpose.msra.mxu0 0.0
        %356 = vmatprep.subr.mxu0 0.0
        %357 = vmatpush1.xpose.msra.mxu0 0.0
        %358 = vmatprep.subr.mxu0 0.0
        %359 = vmatpush1.xpose.msra.mxu0 0.0
        %360 = vmatprep.subr.mxu0 0.0
        %361 = vmatpush1.xpose.msra.mxu0 0.0
        %362 = vmatprep.subr.mxu0 0.0
        %363 = vmatpush1.xpose.msra.mxu0 0.0
        %364 = vmatprep.subr.mxu0 0.0
        %365 = vmatpush1.xpose.msra.mxu0 0.0
        %366 = vmatprep.subr.mxu0 0.0
        %367 = vmatpush1.xpose.msra.mxu0 0.0
        %368 = vmatprep.subr.mxu0 0.0
        %369 = vmatpush1.xpose.msra.mxu0 0.0
        %370 = vmatprep.subr.mxu0 0.0
        %371 = vmatpush1.xpose.msra.mxu0 0.0
        %372 = vmatprep.subr.mxu0 0.0
        %373 = vmatpush1.xpose.msra.mxu0 0.0
        %374 = vmatprep.subr.mxu0 0.0
        %375 = vmatpush1.xpose.msra.mxu0 0.0
        %376 = vmatprep.subr.mxu0 0.0
        %377 = vmatpush1.xpose.msra.mxu0 0.0
        %378 = vmatprep.subr.mxu0 0.0
        %379 = vmatpush1.xpose.msra.mxu0 0.0
        %380 = vmatprep.subr.mxu0 0.0
        %381 = vmatpush1.xpose.msra.mxu0 0.0
        %382 = vmatprep.subr.mxu0 0.0
        %383 = vmatpush1.xpose.msra.mxu0 0.0
        %384 = vmatprep.subr.mxu0 0.0
        %385 = vmatpush1.xpose.msra.mxu0 0.0
        %386 = vmatprep.subr.mxu0 0.0
        %387 = vmatpush1.xpose.msra.mxu0 0.0
        %388 = vmatprep.subr.mxu0 0.0
        %389 = vmatpush1.xpose.msra.mxu0 0.0
        %390 = vmatprep.subr.mxu0 0.0
        %391 = vmatpush1.xpose.msra.mxu0 0.0
        %392 = vmatprep.subr.mxu0 0.0
        %393 = vmatpush1.xpose.msra.mxu0 0.0
        %394 = vmatprep.subr.mxu0 0.0
        %395 = vmatpush1.xpose.msra.mxu0 0.0
        %396 = vmatprep.subr.mxu0 0.0
        %397 = vmatpush1.xpose.msra.mxu0 0.0
        %398 = vmatprep.subr.mxu0 0.0
        %399 = vmatpush1.xpose.msra.mxu0 0.0
        %v400 = vand.u32 %v312, 4294901760
        %v401 = vsub.f32 %v312, %v400
        %v402 = vand.u32 %v401, 4294901760
        %v403 = vsub.f32 %v401, %v402
        %v404 = vand.u32 %v403, 4294901760
        %405 = vmatprep.mubr.f32.mxu0 %v404
        %v406 = vand.u32 %v311, 4294901760
        %v407 = vsub.f32 %v311, %v406
        %v408 = vand.u32 %v407, 4294901760
        %v409 = vsub.f32 %v407, %v408
        %v410 = vand.u32 %v409, 4294901760
        %411 = vmatmul.mubr.f32.gmra.mrb[0].mxu0 %v410
        %v412 = vpop.f32.mrb[0].mxu0
        %v413 = vadd.f32 %v326, %v412
        %v414 = vpop.f32.mrb[0].mxu0
        %415 = vdwg.mxu0
        %v416 = vand.u32 %v314, 4294901760
        %v417 = vsub.f32 %v314, %v416
        %v418 = vand.u32 %v417, 4294901760
        %v419 = vsub.f32 %v417, %v418
        %v420 = vand.u32 %v419, 4294901760
        %421 = vmatprep.subr.mxu0 %v420
        %v422 = vand.u32 %v313, 4294901760
        %v423 = vsub.f32 %v313, %v422
        %v424 = vand.u32 %v423, 4294901760
        %v425 = vsub.f32 %v423, %v424
        %v426 = vand.u32 %v425, 4294901760
        %427 = vmatpush1.xpose.msra.mxu0 %v426
        %v428 = vand.u32 %v316, 4294901760
        %v429 = vsub.f32 %v316, %v428
        %v430 = vand.u32 %v429, 4294901760
        %v431 = vsub.f32 %v429, %v430
        %v432 = vand.u32 %v431, 4294901760
        %433 = vmatprep.subr.mxu0 %v432
        %v434 = vand.u32 %v315, 4294901760
        %v435 = vsub.f32 %v315, %v434
        %v436 = vand.u32 %v435, 4294901760
        %v437 = vsub.f32 %v435, %v436
        %v438 = vand.u32 %v437, 4294901760
        %439 = vmatpush1.xpose.msra.mxu0 %v438
        %v440 = vand.u32 %v318, 4294901760
        %v441 = vsub.f32 %v318, %v440
        %v442 = vand.u32 %v441, 4294901760
        %v443 = vsub.f32 %v441, %v442
        %v444 = vand.u32 %v443, 4294901760
        %445 = vmatprep.subr.mxu0 %v444
        %v446 = vand.u32 %v317, 4294901760
        %v447 = vsub.f32 %v317, %v446
        %v448 = vand.u32 %v447, 4294901760
        %v449 = vsub.f32 %v447, %v448
        %v450 = vand.u32 %v449, 4294901760
        %451 = vmatpush1.xpose.msra.mxu0 %v450
        %v452 = vand.u32 %v320, 4294901760
        %v453 = vsub.f32 %v320, %v452
        %v454 = vand.u32 %v453, 4294901760
        %v455 = vsub.f32 %v453, %v454
        %v456 = vand.u32 %v455, 4294901760
        %457 = vmatprep.subr.mxu0 %v456
        %v458 = vand.u32 %v319, 4294901760
        %v459 = vsub.f32 %v319, %v458
        %v460 = vand.u32 %v459, 4294901760
        %v461 = vsub.f32 %v459, %v460
        %v462 = vand.u32 %v461, 4294901760
        %463 = vmatpush1.xpose.msra.mxu0 %v462
        %464 = vmatprep.subr.mxu0 0.0
        %465 = vmatpush1.xpose.msra.mxu0 0.0
        %466 = vmatprep.subr.mxu0 0.0
        %467 = vmatpush1.xpose.msra.mxu0 0.0
        %468 = vmatprep.subr.mxu0 0.0
        %469 = vmatpush1.xpose.msra.mxu0 0.0
        %470 = vmatprep.subr.mxu0 0.0
        %471 = vmatpush1.xpose.msra.mxu0 0.0
        %472 = vmatprep.subr.mxu0 0.0
        %473 = vmatpush1.xpose.msra.mxu0 0.0
        %474 = vmatprep.subr.mxu0 0.0
        %475 = vmatpush1.xpose.msra.mxu0 0.0
        %476 = vmatprep.subr.mxu0 0.0
        %477 = vmatpush1.xpose.msra.mxu0 0.0
        %478 = vmatprep.subr.mxu0 0.0
        %479 = vmatpush1.xpose.msra.mxu0 0.0
        %480 = vmatprep.subr.mxu0 0.0
        %481 = vmatpush1.xpose.msra.mxu0 0.0
        %482 = vmatprep.subr.mxu0 0.0
        %483 = vmatpush1.xpose.msra.mxu0 0.0
        %484 = vmatprep.subr.mxu0 0.0
        %485 = vmatpush1.xpose.msra.mxu0 0.0
        %486 = vmatprep.subr.mxu0 0.0
        %487 = vmatpush1.xpose.msra.mxu0 0.0
        %488 = vmatprep.subr.mxu0 0.0
        %489 = vmatpush1.xpose.msra.mxu0 0.0
        %490 = vmatprep.subr.mxu0 0.0
        %491 = vmatpush1.xpose.msra.mxu0 0.0
        %492 = vmatprep.subr.mxu0 0.0
        %493 = vmatpush1.xpose.msra.mxu0 0.0
        %494 = vmatprep.subr.mxu0 0.0
        %495 = vmatpush1.xpose.msra.mxu0 0.0
        %496 = vmatprep.subr.mxu0 0.0
        %497 = vmatpush1.xpose.msra.mxu0 0.0
        %498 = vmatprep.subr.mxu0 0.0
        %499 = vmatpush1.xpose.msra.mxu0 0.0
        %500 = vmatprep.subr.mxu0 0.0
        %501 = vmatpush1.xpose.msra.mxu0 0.0
        %502 = vmatprep.subr.mxu0 0.0
        %503 = vmatpush1.xpose.msra.mxu0 0.0
        %504 = vmatprep.subr.mxu0 0.0
        %505 = vmatpush1.xpose.msra.mxu0 0.0
        %506 = vmatprep.subr.mxu0 0.0
        %507 = vmatpush1.xpose.msra.mxu0 0.0
        %508 = vmatprep.subr.mxu0 0.0
        %509 = vmatpush1.xpose.msra.mxu0 0.0
        %510 = vmatprep.subr.mxu0 0.0
        %511 = vmatpush1.xpose.msra.mxu0 0.0
        %512 = vmatprep.subr.mxu0 0.0
        %513 = vmatpush1.xpose.msra.mxu0 0.0
        %514 = vmatprep.subr.mxu0 0.0
        %515 = vmatpush1.xpose.msra.mxu0 0.0
        %516 = vmatprep.subr.mxu0 0.0
        %517 = vmatpush1.xpose.msra.mxu0 0.0
        %518 = vmatprep.subr.mxu0 0.0
        %519 = vmatpush1.xpose.msra.mxu0 0.0
        %v520 = vand.u32 %v312, 4294901760
        %521 = vmatprep.mubr.f32.mxu0 %v520
        %v522 = vand.u32 %v311, 4294901760
        %523 = vmatmul.mubr.f32.gmra.mrb[0].mxu0 %v522
        %v524 = vpop.f32.mrb[0].mxu0
        %v525 = vadd.f32 %v413, %v524
        %v526 = vpop.f32.mrb[0].mxu0
        %527 = vdwg.mxu0
        %v528 = vand.u32 %v314, 4294901760
        %v529 = vsub.f32 %v314, %v528
        %530 = vmatprep.subr.mxu0 %v529
        %v531 = vand.u32 %v313, 4294901760
        %v532 = vsub.f32 %v313, %v531
        %533 = vmatpush1.xpose.msra.mxu0 %v532
        %v534 = vand.u32 %v316, 4294901760
        %v535 = vsub.f32 %v316, %v534
        %536 = vmatprep.subr.mxu0 %v535
        %v537 = vand.u32 %v315, 4294901760
        %v538 = vsub.f32 %v315, %v537
        %539 = vmatpush1.xpose.msra.mxu0 %v538
        %v540 = vand.u32 %v318, 4294901760
        %v541 = vsub.f32 %v318, %v540
        %542 = vmatprep.subr.mxu0 %v541
        %v543 = vand.u32 %v317, 4294901760
        %v544 = vsub.f32 %v317, %v543
        %545 = vmatpush1.xpose.msra.mxu0 %v544
        %v546 = vand.u32 %v320, 4294901760
        %v547 = vsub.f32 %v320, %v546
        %548 = vmatprep.subr.mxu0 %v547
        %v549 = vand.u32 %v319, 4294901760
        %v550 = vsub.f32 %v319, %v549
        %551 = vmatpush1.xpose.msra.mxu0 %v550
        %552 = vmatprep.subr.mxu0 0.0
        %553 = vmatpush1.xpose.msra.mxu0 0.0
        %554 = vmatprep.subr.mxu0 0.0
        %555 = vmatpush1.xpose.msra.mxu0 0.0
        %556 = vmatprep.subr.mxu0 0.0
        %557 = vmatpush1.xpose.msra.mxu0 0.0
        %558 = vmatprep.subr.mxu0 0.0
        %559 = vmatpush1.xpose.msra.mxu0 0.0
        %560 = vmatprep.subr.mxu0 0.0
        %561 = vmatpush1.xpose.msra.mxu0 0.0
        %562 = vmatprep.subr.mxu0 0.0
        %563 = vmatpush1.xpose.msra.mxu0 0.0
        %564 = vmatprep.subr.mxu0 0.0
        %565 = vmatpush1.xpose.msra.mxu0 0.0
        %566 = vmatprep.subr.mxu0 0.0
        %567 = vmatpush1.xpose.msra.mxu0 0.0
        %568 = vmatprep.subr.mxu0 0.0
        %569 = vmatpush1.xpose.msra.mxu0 0.0
        %570 = vmatprep.subr.mxu0 0.0
        %571 = vmatpush1.xpose.msra.mxu0 0.0
        %572 = vmatprep.subr.mxu0 0.0
        %573 = vmatpush1.xpose.msra.mxu0 0.0
        %574 = vmatprep.subr.mxu0 0.0
        %575 = vmatpush1.xpose.msra.mxu0 0.0
        %576 = vmatprep.subr.mxu0 0.0
        %577 = vmatpush1.xpose.msra.mxu0 0.0
        %578 = vmatprep.subr.mxu0 0.0
        %579 = vmatpush1.xpose.msra.mxu0 0.0
        %580 = vmatprep.subr.mxu0 0.0
        %581 = vmatpush1.xpose.msra.mxu0 0.0
        %582 = vmatprep.subr.mxu0 0.0
        %583 = vmatpush1.xpose.msra.mxu0 0.0
        %584 = vmatprep.subr.mxu0 0.0
        %585 = vmatpush1.xpose.msra.mxu0 0.0
        %586 = vmatprep.subr.mxu0 0.0
        %587 = vmatpush1.xpose.msra.mxu0 0.0
        %588 = vmatprep.subr.mxu0 0.0
        %589 = vmatpush1.xpose.msra.mxu0 0.0
        %590 = vmatprep.subr.mxu0 0.0
        %591 = vmatpush1.xpose.msra.mxu0 0.0
        %592 = vmatprep.subr.mxu0 0.0
        %593 = vmatpush1.xpose.msra.mxu0 0.0
        %594 = vmatprep.subr.mxu0 0.0
        %595 = vmatpush1.xpose.msra.mxu0 0.0
        %596 = vmatprep.subr.mxu0 0.0
        %597 = vmatpush1.xpose.msra.mxu0 0.0
        %598 = vmatprep.subr.mxu0 0.0
        %599 = vmatpush1.xpose.msra.mxu0 0.0
        %600 = vmatprep.subr.mxu0 0.0
        %601 = vmatpush1.xpose.msra.mxu0 0.0
        %602 = vmatprep.subr.mxu0 0.0
        %603 = vmatpush1.xpose.msra.mxu0 0.0
        %604 = vmatprep.subr.mxu0 0.0
        %605 = vmatpush1.xpose.msra.mxu0 0.0
        %606 = vmatprep.subr.mxu0 0.0
        %607 = vmatpush1.xpose.msra.mxu0 0.0
        %v608 = vand.u32 %v312, 4294901760
        %v609 = vsub.f32 %v312, %v608
        %610 = vmatprep.mubr.f32.mxu0 %v609
        %v611 = vand.u32 %v311, 4294901760
        %v612 = vsub.f32 %v311, %v611
        %613 = vmatmul.mubr.f32.gmra.mrb[0].mxu0 %v612
        %v614 = vpop.f32.mrb[0].mxu0
        %v615 = vadd.f32 %v525, %v614
        %v616 = vpop.f32.mrb[0].mxu0
        %617 = vdwg.mxu0
        %v618 = vand.u32 %v314, 4294901760
        %619 = vmatprep.subr.mxu0 %v618
        %v620 = vand.u32 %v313, 4294901760
        %621 = vmatpush1.xpose.msra.mxu0 %v620
        %v622 = vand.u32 %v316, 4294901760
        %623 = vmatprep.subr.mxu0 %v622
        %v624 = vand.u32 %v315, 4294901760
        %625 = vmatpush1.xpose.msra.mxu0 %v624
        %v626 = vand.u32 %v318, 4294901760
        %627 = vmatprep.subr.mxu0 %v626
        %v628 = vand.u32 %v317, 4294901760
        %629 = vmatpush1.xpose.msra.mxu0 %v628
        %v630 = vand.u32 %v320, 4294901760
        %631 = vmatprep.subr.mxu0 %v630
        %v632 = vand.u32 %v319, 4294901760
        %633 = vmatpush1.xpose.msra.mxu0 %v632
        %634 = vmatprep.subr.mxu0 0.0
        %635 = vmatpush1.xpose.msra.mxu0 0.0
        %636 = vmatprep.subr.mxu0 0.0
        %637 = vmatpush1.xpose.msra.mxu0 0.0
        %638 = vmatprep.subr.mxu0 0.0
        %639 = vmatpush1.xpose.msra.mxu0 0.0
        %640 = vmatprep.subr.mxu0 0.0
        %641 = vmatpush1.xpose.msra.mxu0 0.0
        %642 = vmatprep.subr.mxu0 0.0
        %643 = vmatpush1.xpose.msra.mxu0 0.0
        %644 = vmatprep.subr.mxu0 0.0
        %645 = vmatpush1.xpose.msra.mxu0 0.0
        %646 = vmatprep.subr.mxu0 0.0
        %647 = vmatpush1.xpose.msra.mxu0 0.0
        %648 = vmatprep.subr.mxu0 0.0
        %649 = vmatpush1.xpose.msra.mxu0 0.0
        %650 = vmatprep.subr.mxu0 0.0
        %651 = vmatpush1.xpose.msra.mxu0 0.0
        %652 = vmatprep.subr.mxu0 0.0
        %653 = vmatpush1.xpose.msra.mxu0 0.0
        %654 = vmatprep.subr.mxu0 0.0
        %655 = vmatpush1.xpose.msra.mxu0 0.0
        %656 = vmatprep.subr.mxu0 0.0
        %657 = vmatpush1.xpose.msra.mxu0 0.0
        %658 = vmatprep.subr.mxu0 0.0
        %659 = vmatpush1.xpose.msra.mxu0 0.0
        %660 = vmatprep.subr.mxu0 0.0
        %661 = vmatpush1.xpose.msra.mxu0 0.0
        %662 = vmatprep.subr.mxu0 0.0
        %663 = vmatpush1.xpose.msra.mxu0 0.0
        %664 = vmatprep.subr.mxu0 0.0
        %665 = vmatpush1.xpose.msra.mxu0 0.0
        %666 = vmatprep.subr.mxu0 0.0
        %667 = vmatpush1.xpose.msra.mxu0 0.0
        %668 = vmatprep.subr.mxu0 0.0
        %669 = vmatpush1.xpose.msra.mxu0 0.0
        %670 = vmatprep.subr.mxu0 0.0
        %671 = vmatpush1.xpose.msra.mxu0 0.0
        %672 = vmatprep.subr.mxu0 0.0
        %673 = vmatpush1.xpose.msra.mxu0 0.0
        %674 = vmatprep.subr.mxu0 0.0
        %675 = vmatpush1.xpose.msra.mxu0 0.0
        %676 = vmatprep.subr.mxu0 0.0
        %677 = vmatpush1.xpose.msra.mxu0 0.0
        %678 = vmatprep.subr.mxu0 0.0
        %679 = vmatpush1.xpose.msra.mxu0 0.0
        %680 = vmatprep.subr.mxu0 0.0
        %681 = vmatpush1.xpose.msra.mxu0 0.0
        %682 = vmatprep.subr.mxu0 0.0
        %683 = vmatpush1.xpose.msra.mxu0 0.0
        %684 = vmatprep.subr.mxu0 0.0
        %685 = vmatpush1.xpose.msra.mxu0 0.0
        %686 = vmatprep.subr.mxu0 0.0
        %687 = vmatpush1.xpose.msra.mxu0 0.0
        %688 = vmatprep.subr.mxu0 0.0
        %689 = vmatpush1.xpose.msra.mxu0 0.0
        %v690 = vand.u32 %v312, 4294901760
        %v691 = vsub.f32 %v312, %v690
        %v692 = vand.u32 %v691, 4294901760
        %693 = vmatprep.mubr.f32.mxu0 %v692
        %v694 = vand.u32 %v311, 4294901760
        %v695 = vsub.f32 %v311, %v694
        %v696 = vand.u32 %v695, 4294901760
        %697 = vmatmul.mubr.f32.gmra.mrb[0].mxu0 %v696
        %v698 = vpop.f32.mrb[0].mxu0
        %v699 = vadd.f32 %v615, %v698
        %v700 = vpop.f32.mrb[0].mxu0
        %701 = vdwg.mxu0
        %v702 = vand.u32 %v314, 4294901760
        %v703 = vsub.f32 %v314, %v702
        %v704 = vand.u32 %v703, 4294901760
        %705 = vmatprep.subr.mxu0 %v704
        %v706 = vand.u32 %v313, 4294901760
        %v707 = vsub.f32 %v313, %v706
        %v708 = vand.u32 %v707, 4294901760
        %709 = vmatpush1.xpose.msra.mxu0 %v708
        %v710 = vand.u32 %v316, 4294901760
        %v711 = vsub.f32 %v316, %v710
        %v712 = vand.u32 %v711, 4294901760
        %713 = vmatprep.subr.mxu0 %v712
        %v714 = vand.u32 %v315, 4294901760
        %v715 = vsub.f32 %v315, %v714
        %v716 = vand.u32 %v715, 4294901760
        %717 = vmatpush1.xpose.msra.mxu0 %v716
        %v718 = vand.u32 %v318, 4294901760
        %v719 = vsub.f32 %v318, %v718
        %v720 = vand.u32 %v719, 4294901760
        %721 = vmatprep.subr.mxu0 %v720
        %v722 = vand.u32 %v317, 4294901760
        %v723 = vsub.f32 %v317, %v722
        %v724 = vand.u32 %v723, 4294901760
        %725 = vmatpush1.xpose.msra.mxu0 %v724
        %v726 = vand.u32 %v320, 4294901760
        %v727 = vsub.f32 %v320, %v726
        %v728 = vand.u32 %v727, 4294901760
        %729 = vmatprep.subr.mxu0 %v728
        %v730 = vand.u32 %v319, 4294901760
        %v731 = vsub.f32 %v319, %v730
        %v732 = vand.u32 %v731, 4294901760
        %733 = vmatpush1.xpose.msra.mxu0 %v732
        %734 = vmatprep.subr.mxu0 0.0
        %735 = vmatpush1.xpose.msra.mxu0 0.0
        %736 = vmatprep.subr.mxu0 0.0
        %737 = vmatpush1.xpose.msra.mxu0 0.0
        %738 = vmatprep.subr.mxu0 0.0
        %739 = vmatpush1.xpose.msra.mxu0 0.0
        %740 = vmatprep.subr.mxu0 0.0
        %741 = vmatpush1.xpose.msra.mxu0 0.0
        %742 = vmatprep.subr.mxu0 0.0
        %743 = vmatpush1.xpose.msra.mxu0 0.0
        %744 = vmatprep.subr.mxu0 0.0
        %745 = vmatpush1.xpose.msra.mxu0 0.0
        %746 = vmatprep.subr.mxu0 0.0
        %747 = vmatpush1.xpose.msra.mxu0 0.0
        %748 = vmatprep.subr.mxu0 0.0
        %749 = vmatpush1.xpose.msra.mxu0 0.0
        %750 = vmatprep.subr.mxu0 0.0
        %751 = vmatpush1.xpose.msra.mxu0 0.0
        %752 = vmatprep.subr.mxu0 0.0
        %753 = vmatpush1.xpose.msra.mxu0 0.0
        %754 = vmatprep.subr.mxu0 0.0
        %755 = vmatpush1.xpose.msra.mxu0 0.0
        %756 = vmatprep.subr.mxu0 0.0
        %757 = vmatpush1.xpose.msra.mxu0 0.0
        %758 = vmatprep.subr.mxu0 0.0
        %759 = vmatpush1.xpose.msra.mxu0 0.0
        %760 = vmatprep.subr.mxu0 0.0
        %761 = vmatpush1.xpose.msra.mxu0 0.0
        %762 = vmatprep.subr.mxu0 0.0
        %763 = vmatpush1.xpose.msra.mxu0 0.0
        %764 = vmatprep.subr.mxu0 0.0
        %765 = vmatpush1.xpose.msra.mxu0 0.0
        %766 = vmatprep.subr.mxu0 0.0
        %767 = vmatpush1.xpose.msra.mxu0 0.0
        %768 = vmatprep.subr.mxu0 0.0
        %769 = vmatpush1.xpose.msra.mxu0 0.0
        %770 = vmatprep.subr.mxu0 0.0
        %771 = vmatpush1.xpose.msra.mxu0 0.0
        %772 = vmatprep.subr.mxu0 0.0
        %773 = vmatpush1.xpose.msra.mxu0 0.0
        %774 = vmatprep.subr.mxu0 0.0
        %775 = vmatpush1.xpose.msra.mxu0 0.0
        %776 = vmatprep.subr.mxu0 0.0
        %777 = vmatpush1.xpose.msra.mxu0 0.0
        %778 = vmatprep.subr.mxu0 0.0
        %779 = vmatpush1.xpose.msra.mxu0 0.0
        %780 = vmatprep.subr.mxu0 0.0
        %781 = vmatpush1.xpose.msra.mxu0 0.0
        %782 = vmatprep.subr.mxu0 0.0
        %783 = vmatpush1.xpose.msra.mxu0 0.0
        %784 = vmatprep.subr.mxu0 0.0
        %785 = vmatpush1.xpose.msra.mxu0 0.0
        %786 = vmatprep.subr.mxu0 0.0
        %787 = vmatpush1.xpose.msra.mxu0 0.0
        %788 = vmatprep.subr.mxu0 0.0
        %789 = vmatpush1.xpose.msra.mxu0 0.0
        %v790 = vand.u32 %v312, 4294901760
        %791 = vmatprep.mubr.f32.mxu0 %v790
        %v792 = vand.u32 %v311, 4294901760
        %793 = vmatmul.mubr.f32.gmra.mrb[0].mxu0 %v792
        %v794 = vpop.f32.mrb[0].mxu0
        %v795 = vadd.f32 %v699, %v794
        %v796 = vpop.f32.mrb[0].mxu0
        %797 = vdwg.mxu0
        %v798 = vand.u32 %v314, 4294901760
        %799 = vmatprep.subr.mxu0 %v798
        %v800 = vand.u32 %v313, 4294901760
        %801 = vmatpush1.xpose.msra.mxu0 %v800
        %v802 = vand.u32 %v316, 4294901760
        %803 = vmatprep.subr.mxu0 %v802
        %v804 = vand.u32 %v315, 4294901760
        %805 = vmatpush1.xpose.msra.mxu0 %v804
        %v806 = vand.u32 %v318, 4294901760
        %807 = vmatprep.subr.mxu0 %v806
        %v808 = vand.u32 %v317, 4294901760
        %809 = vmatpush1.xpose.msra.mxu0 %v808
        %v810 = vand.u32 %v320, 4294901760
        %811 = vmatprep.subr.mxu0 %v810
        %v812 = vand.u32 %v319, 4294901760
        %813 = vmatpush1.xpose.msra.mxu0 %v812
        %814 = vmatprep.subr.mxu0 0.0
        %815 = vmatpush1.xpose.msra.mxu0 0.0
        %816 = vmatprep.subr.mxu0 0.0
        %817 = vmatpush1.xpose.msra.mxu0 0.0
        %818 = vmatprep.subr.mxu0 0.0
        %819 = vmatpush1.xpose.msra.mxu0 0.0
        %820 = vmatprep.subr.mxu0 0.0
        %821 = vmatpush1.xpose.msra.mxu0 0.0
        %822 = vmatprep.subr.mxu0 0.0
        %823 = vmatpush1.xpose.msra.mxu0 0.0
        %824 = vmatprep.subr.mxu0 0.0
        %825 = vmatpush1.xpose.msra.mxu0 0.0
        %826 = vmatprep.subr.mxu0 0.0
        %827 = vmatpush1.xpose.msra.mxu0 0.0
        %828 = vmatprep.subr.mxu0 0.0
        %829 = vmatpush1.xpose.msra.mxu0 0.0
        %830 = vmatprep.subr.mxu0 0.0
        %831 = vmatpush1.xpose.msra.mxu0 0.0
        %832 = vmatprep.subr.mxu0 0.0
        %833 = vmatpush1.xpose.msra.mxu0 0.0
        %834 = vmatprep.subr.mxu0 0.0
        %835 = vmatpush1.xpose.msra.mxu0 0.0
        %836 = vmatprep.subr.mxu0 0.0
        %837 = vmatpush1.xpose.msra.mxu0 0.0
        %838 = vmatprep.subr.mxu0 0.0
        %839 = vmatpush1.xpose.msra.mxu0 0.0
        %840 = vmatprep.subr.mxu0 0.0
        %841 = vmatpush1.xpose.msra.mxu0 0.0
        %842 = vmatprep.subr.mxu0 0.0
        %843 = vmatpush1.xpose.msra.mxu0 0.0
        %844 = vmatprep.subr.mxu0 0.0
        %845 = vmatpush1.xpose.msra.mxu0 0.0
        %846 = vmatprep.subr.mxu0 0.0
        %847 = vmatpush1.xpose.msra.mxu0 0.0
        %848 = vmatprep.subr.mxu0 0.0
        %849 = vmatpush1.xpose.msra.mxu0 0.0
        %850 = vmatprep.subr.mxu0 0.0
        %851 = vmatpush1.xpose.msra.mxu0 0.0
        %852 = vmatprep.subr.mxu0 0.0
        %853 = vmatpush1.xpose.msra.mxu0 0.0
        %854 = vmatprep.subr.mxu0 0.0
        %855 = vmatpush1.xpose.msra.mxu0 0.0
        %856 = vmatprep.subr.mxu0 0.0
        %857 = vmatpush1.xpose.msra.mxu0 0.0
        %858 = vmatprep.subr.mxu0 0.0
        %859 = vmatpush1.xpose.msra.mxu0 0.0
        %860 = vmatprep.subr.mxu0 0.0
        %861 = vmatpush1.xpose.msra.mxu0 0.0
        %862 = vmatprep.subr.mxu0 0.0
        %863 = vmatpush1.xpose.msra.mxu0 0.0
        %864 = vmatprep.subr.mxu0 0.0
        %865 = vmatpush1.xpose.msra.mxu0 0.0
        %866 = vmatprep.subr.mxu0 0.0
        %867 = vmatpush1.xpose.msra.mxu0 0.0
        %868 = vmatprep.subr.mxu0 0.0
        %869 = vmatpush1.xpose.msra.mxu0 0.0
        %v870 = vand.u32 %v312, 4294901760
        %871 = vmatprep.mubr.f32.mxu0 %v870
        %v872 = vand.u32 %v311, 4294901760
        %873 = vmatmul.mubr.f32.gmra.mrb[0].mxu0 %v872
        %v874 = vpop.f32.mrb[0].mxu0
        %v875 = vadd.f32 %v795, %v874
        %v876 = vpop.f32.mrb[0].mxu0
        %877 = vdwg.mxu0
        %v878 = vmax.f32 %v875, 0.0
        %v879 = vld [vmem:[%s307] sm:$0xff]
        %v880 = vld [vmem:[%s307 + $0x8] sm:$0x3]
        %v881 = vld [vmem:[%s310] sm:$0x1]
        %v883 = vlaneseq
        %v884 = vshrl.u32 %v883, 7
        %v885 = vsub.s32 0, %v884
        %v886 = vrot.slane %v881, %v885
        %vm888 = vcmask 261120
        %v890 = vsel %vm888, %v878, 0
        %v893 = vsel %vm888, %v879, 0
        %v896 = vsel %vm888, %v880, 0
        %898 = vmatprep.subr.mxu0 0.0
        %v899 = vand.u32 %v893, 4294901760
        %900 = vmatpush1.xpose.msra.mxu0 %v899
        %901 = vmatprep.subr.mxu0 0.0
        %v902 = vand.u32 %v896, 4294901760
        %903 = vmatpush1.xpose.msra.mxu0 %v902
        %904 = vmatprep.subr.mxu0 0.0
        %905 = vmatpush1.xpose.msra.mxu0 0.0
        %906 = vmatprep.subr.mxu0 0.0
        %907 = vmatpush1.xpose.msra.mxu0 0.0
        %908 = vmatprep.subr.mxu0 0.0
        %909 = vmatpush1.xpose.msra.mxu0 0.0
        %910 = vmatprep.subr.mxu0 0.0
        %911 = vmatpush1.xpose.msra.mxu0 0.0
        %912 = vmatprep.subr.mxu0 0.0
        %913 = vmatpush1.xpose.msra.mxu0 0.0
        %914 = vmatprep.subr.mxu0 0.0
        %915 = vmatpush1.xpose.msra.mxu0 0.0
        %916 = vmatprep.subr.mxu0 0.0
        %917 = vmatpush1.xpose.msra.mxu0 0.0
        %918 = vmatprep.subr.mxu0 0.0
        %919 = vmatpush1.xpose.msra.mxu0 0.0
        %920 = vmatprep.subr.mxu0 0.0
        %921 = vmatpush1.xpose.msra.mxu0 0.0
        %922 = vmatprep.subr.mxu0 0.0
        %923 = vmatpush1.xpose.msra.mxu0 0.0
        %924 = vmatprep.subr.mxu0 0.0
        %925 = vmatpush1.xpose.msra.mxu0 0.0
        %926 = vmatprep.subr.mxu0 0.0
        %927 = vmatpush1.xpose.msra.mxu0 0.0
        %928 = vmatprep.subr.mxu0 0.0
        %929 = vmatpush1.xpose.msra.mxu0 0.0
        %930 = vmatprep.subr.mxu0 0.0
        %931 = vmatpush1.xpose.msra.mxu0 0.0
        %932 = vmatprep.subr.mxu0 0.0
        %933 = vmatpush1.xpose.msra.mxu0 0.0
        %934 = vmatprep.subr.mxu0 0.0
        %935 = vmatpush1.xpose.msra.mxu0 0.0
        %936 = vmatprep.subr.mxu0 0.0
        %937 = vmatpush1.xpose.msra.mxu0 0.0
        %938 = vmatprep.subr.mxu0 0.0
        %939 = vmatpush1.xpose.msra.mxu0 0.0
        %940 = vmatprep.subr.mxu0 0.0
        %941 = vmatpush1.xpose.msra.mxu0 0.0
        %942 = vmatprep.subr.mxu0 0.0
        %943 = vmatpush1.xpose.msra.mxu0 0.0
        %944 = vmatprep.subr.mxu0 0.0
        %945 = vmatpush1.xpose.msra.mxu0 0.0
        %946 = vmatprep.subr.mxu0 0.0
        %947 = vmatpush1.xpose.msra.mxu0 0.0
        %948 = vmatprep.subr.mxu0 0.0
        %949 = vmatpush1.xpose.msra.mxu0 0.0
        %950 = vmatprep.subr.mxu0 0.0
        %951 = vmatpush1.xpose.msra.mxu0 0.0
        %952 = vmatprep.subr.mxu0 0.0
        %953 = vmatpush1.xpose.msra.mxu0 0.0
        %954 = vmatprep.subr.mxu0 0.0
        %955 = vmatpush1.xpose.msra.mxu0 0.0
        %956 = vmatprep.subr.mxu0 0.0
        %957 = vmatpush1.xpose.msra.mxu0 0.0
        %958 = vmatprep.subr.mxu0 0.0
        %959 = vmatpush1.xpose.msra.mxu0 0.0
        %960 = vmatprep.subr.mxu0 0.0
        %961 = vmatpush1.xpose.msra.mxu0 0.0
        %962 = vmatprep.subr.mxu0 0.0
        %963 = vmatpush1.xpose.msra.mxu0 0.0
        %964 = vmatprep.mubr.f32.mxu0 0.0
        %v965 = vand.u32 %v890, 4294901760
        %v966 = vsub.f32 %v890, %v965
        %v967 = vand.u32 %v966, 4294901760
        %v968 = vsub.f32 %v966, %v967
        %v969 = vand.u32 %v968, 4294901760
        %970 = vmatmul.mubr.f32.gmra.mrb[0].mxu0 %v969
        %v971 = vpop.f32.mrb[0].mxu0
        %v972 = vadd.f32 %v886, %v971
        %v973 = vpop.f32.mrb[0].mxu0
        %974 = vdwg.mxu0
        %975 = vmatprep.subr.mxu0 0.0
        %v976 = vand.u32 %v893, 4294901760
        %v977 = vsub.f32 %v893, %v976
        %v978 = vand.u32 %v977, 4294901760
        %v979 = vsub.f32 %v977, %v978
        %v980 = vand.u32 %v979, 4294901760
        %981 = vmatpush1.xpose.msra.mxu0 %v980
        %982 = vmatprep.subr.mxu0 0.0
        %v983 = vand.u32 %v896, 4294901760
        %v984 = vsub.f32 %v896, %v983
        %v985 = vand.u32 %v984, 4294901760
        %v986 = vsub.f32 %v984, %v985
        %v987 = vand.u32 %v986, 4294901760
        %988 = vmatpush1.xpose.msra.mxu0 %v987
        %989 = vmatprep.subr.mxu0 0.0
        %990 = vmatpush1.xpose.msra.mxu0 0.0
        %991 = vmatprep.subr.mxu0 0.0
        %992 = vmatpush1.xpose.msra.mxu0 0.0
        %993 = vmatprep.subr.mxu0 0.0
        %994 = vmatpush1.xpose.msra.mxu0 0.0
        %995 = vmatprep.subr.mxu0 0.0
        %996 = vmatpush1.xpose.msra.mxu0 0.0
        %997 = vmatprep.subr.mxu0 0.0
        %998 = vmatpush1.xpose.msra.mxu0 0.0
        %999 = vmatprep.subr.mxu0 0.0
        %1000 = vmatpush1.xpose.msra.mxu0 0.0
        %1001 = vmatprep.subr.mxu0 0.0
        %1002 = vmatpush1.xpose.msra.mxu0 0.0
        %1003 = vmatprep.subr.mxu0 0.0
        %1004 = vmatpush1.xpose.msra.mxu0 0.0
        %1005 = vmatprep.subr.mxu0 0.0
        %1006 = vmatpush1.xpose.msra.mxu0 0.0
        %1007 = vmatprep.subr.mxu0 0.0
        %1008 = vmatpush1.xpose.msra.mxu0 0.0
        %1009 = vmatprep.subr.mxu0 0.0
        %1010 = vmatpush1.xpose.msra.mxu0 0.0
        %1011 = vmatprep.subr.mxu0 0.0
        %1012 = vmatpush1.xpose.msra.mxu0 0.0
        %1013 = vmatprep.subr.mxu0 0.0
        %1014 = vmatpush1.xpose.msra.mxu0 0.0
        %1015 = vmatprep.subr.mxu0 0.0
        %1016 = vmatpush1.xpose.msra.mxu0 0.0
        %1017 = vmatprep.subr.mxu0 0.0
        %1018 = vmatpush1.xpose.msra.mxu0 0.0
        %1019 = vmatprep.subr.mxu0 0.0
        %1020 = vmatpush1.xpose.msra.mxu0 0.0
        %1021 = vmatprep.subr.mxu0 0.0
        %1022 = vmatpush1.xpose.msra.mxu0 0.0
        %1023 = vmatprep.subr.mxu0 0.0
        %1024 = vmatpush1.xpose.msra.mxu0 0.0
        %1025 = vmatprep.subr.mxu0 0.0
        %1026 = vmatpush1.xpose.msra.mxu0 0.0
        %1027 = vmatprep.subr.mxu0 0.0
        %1028 = vmatpush1.xpose.msra.mxu0 0.0
        %1029 = vmatprep.subr.mxu0 0.0
        %1030 = vmatpush1.xpose.msra.mxu0 0.0
        %1031 = vmatprep.subr.mxu0 0.0
        %1032 = vmatpush1.xpose.msra.mxu0 0.0
        %1033 = vmatprep.subr.mxu0 0.0
        %1034 = vmatpush1.xpose.msra.mxu0 0.0
        %1035 = vmatprep.subr.mxu0 0.0
        %1036 = vmatpush1.xpose.msra.mxu0 0.0
        %1037 = vmatprep.subr.mxu0 0.0
        %1038 = vmatpush1.xpose.msra.mxu0 0.0
        %1039 = vmatprep.subr.mxu0 0.0
        %1040 = vmatpush1.xpose.msra.mxu0 0.0
        %1041 = vmatprep.subr.mxu0 0.0
        %1042 = vmatpush1.xpose.msra.mxu0 0.0
        %1043 = vmatprep.subr.mxu0 0.0
        %1044 = vmatpush1.xpose.msra.mxu0 0.0
        %1045 = vmatprep.subr.mxu0 0.0
        %1046 = vmatpush1.xpose.msra.mxu0 0.0
        %1047 = vmatprep.subr.mxu0 0.0
        %1048 = vmatpush1.xpose.msra.mxu0 0.0
        %1049 = vmatprep.mubr.f32.mxu0 0.0
        %v1050 = vand.u32 %v890, 4294901760
        %1051 = vmatmul.mubr.f32.gmra.mrb[0].mxu0 %v1050
        %v1052 = vpop.f32.mrb[0].mxu0
        %v1053 = vadd.f32 %v972, %v1052
        %v1054 = vpop.f32.mrb[0].mxu0
        %1055 = vdwg.mxu0
        %1056 = vmatprep.subr.mxu0 0.0
        %v1057 = vand.u32 %v893, 4294901760
        %v1058 = vsub.f32 %v893, %v1057
        %1059 = vmatpush1.xpose.msra.mxu0 %v1058
        %1060 = vmatprep.subr.mxu0 0.0
        %v1061 = vand.u32 %v896, 4294901760
        %v1062 = vsub.f32 %v896, %v1061
        %1063 = vmatpush1.xpose.msra.mxu0 %v1062
        %1064 = vmatprep.subr.mxu0 0.0
        %1065 = vmatpush1.xpose.msra.mxu0 0.0
        %1066 = vmatprep.subr.mxu0 0.0
        %1067 = vmatpush1.xpose.msra.mxu0 0.0
        %1068 = vmatprep.subr.mxu0 0.0
        %1069 = vmatpush1.xpose.msra.mxu0 0.0
        %1070 = vmatprep.subr.mxu0 0.0
        %1071 = vmatpush1.xpose.msra.mxu0 0.0
        %1072 = vmatprep.subr.mxu0 0.0
        %1073 = vmatpush1.xpose.msra.mxu0 0.0
        %1074 = vmatprep.subr.mxu0 0.0
        %1075 = vmatpush1.xpose.msra.mxu0 0.0
        %1076 = vmatprep.subr.mxu0 0.0
        %1077 = vmatpush1.xpose.msra.mxu0 0.0
        %1078 = vmatprep.subr.mxu0 0.0
        %1079 = vmatpush1.xpose.msra.mxu0 0.0
        %1080 = vmatprep.subr.mxu0 0.0
        %1081 = vmatpush1.xpose.msra.mxu0 0.0
        %1082 = vmatprep.subr.mxu0 0.0
        %1083 = vmatpush1.xpose.msra.mxu0 0.0
        %1084 = vmatprep.subr.mxu0 0.0
        %1085 = vmatpush1.xpose.msra.mxu0 0.0
        %1086 = vmatprep.subr.mxu0 0.0
        %1087 = vmatpush1.xpose.msra.mxu0 0.0
        %1088 = vmatprep.subr.mxu0 0.0
        %1089 = vmatpush1.xpose.msra.mxu0 0.0
        %1090 = vmatprep.subr.mxu0 0.0
        %1091 = vmatpush1.xpose.msra.mxu0 0.0
        %1092 = vmatprep.subr.mxu0 0.0
        %1093 = vmatpush1.xpose.msra.mxu0 0.0
        %1094 = vmatprep.subr.mxu0 0.0
        %1095 = vmatpush1.xpose.msra.mxu0 0.0
        %1096 = vmatprep.subr.mxu0 0.0
        %1097 = vmatpush1.xpose.msra.mxu0 0.0
        %1098 = vmatprep.subr.mxu0 0.0
        %1099 = vmatpush1.xpose.msra.mxu0 0.0
        %1100 = vmatprep.subr.mxu0 0.0
        %1101 = vmatpush1.xpose.msra.mxu0 0.0
        %1102 = vmatprep.subr.mxu0 0.0
        %1103 = vmatpush1.xpose.msra.mxu0 0.0
        %1104 = vmatprep.subr.mxu0 0.0
        %1105 = vmatpush1.xpose.msra.mxu0 0.0
        %1106 = vmatprep.subr.mxu0 0.0
        %1107 = vmatpush1.xpose.msra.mxu0 0.0
        %1108 = vmatprep.subr.mxu0 0.0
        %1109 = vmatpush1.xpose.msra.mxu0 0.0
        %1110 = vmatprep.subr.mxu0 0.0
        %1111 = vmatpush1.xpose.msra.mxu0 0.0
        %1112 = vmatprep.subr.mxu0 0.0
        %1113 = vmatpush1.xpose.msra.mxu0 0.0
        %1114 = vmatprep.subr.mxu0 0.0
        %1115 = vmatpush1.xpose.msra.mxu0 0.0
        %1116 = vmatprep.subr.mxu0 0.0
        %1117 = vmatpush1.xpose.msra.mxu0 0.0
        %1118 = vmatprep.subr.mxu0 0.0
        %1119 = vmatpush1.xpose.msra.mxu0 0.0
        %1120 = vmatprep.subr.mxu0 0.0
        %1121 = vmatpush1.xpose.msra.mxu0 0.0
        %1122 = vmatprep.subr.mxu0 0.0
        %1123 = vmatpush1.xpose.msra.mxu0 0.0
        %1124 = vmatprep.mubr.f32.mxu0 0.0
        %v1125 = vand.u32 %v890, 4294901760
        %v1126 = vsub.f32 %v890, %v1125
        %1127 = vmatmul.mubr.f32.gmra.mrb[0].mxu0 %v1126
        %v1128 = vpop.f32.mrb[0].mxu0
        %v1129 = vadd.f32 %v1053, %v1128
        %v1130 = vpop.f32.mrb[0].mxu0
        %1131 = vdwg.mxu0
        %1132 = vmatprep.subr.mxu0 0.0
        %v1133 = vand.u32 %v893, 4294901760
        %1134 = vmatpush1.xpose.msra.mxu0 %v1133
        %1135 = vmatprep.subr.mxu0 0.0
        %v1136 = vand.u32 %v896, 4294901760
        %1137 = vmatpush1.xpose.msra.mxu0 %v1136
        %1138 = vmatprep.subr.mxu0 0.0
        %1139 = vmatpush1.xpose.msra.mxu0 0.0
        %1140 = vmatprep.subr.mxu0 0.0
        %1141 = vmatpush1.xpose.msra.mxu0 0.0
        %1142 = vmatprep.subr.mxu0 0.0
        %1143 = vmatpush1.xpose.msra.mxu0 0.0
        %1144 = vmatprep.subr.mxu0 0.0
        %1145 = vmatpush1.xpose.msra.mxu0 0.0
        %1146 = vmatprep.subr.mxu0 0.0
        %1147 = vmatpush1.xpose.msra.mxu0 0.0
        %1148 = vmatprep.subr.mxu0 0.0
        %1149 = vmatpush1.xpose.msra.mxu0 0.0
        %1150 = vmatprep.subr.mxu0 0.0
        %1151 = vmatpush1.xpose.msra.mxu0 0.0
        %1152 = vmatprep.subr.mxu0 0.0
        %1153 = vmatpush1.xpose.msra.mxu0 0.0
        %1154 = vmatprep.subr.mxu0 0.0
        %1155 = vmatpush1.xpose.msra.mxu0 0.0
        %1156 = vmatprep.subr.mxu0 0.0
        %1157 = vmatpush1.xpose.msra.mxu0 0.0
        %1158 = vmatprep.subr.mxu0 0.0
        %1159 = vmatpush1.xpose.msra.mxu0 0.0
        %1160 = vmatprep.subr.mxu0 0.0
        %1161 = vmatpush1.xpose.msra.mxu0 0.0
        %1162 = vmatprep.subr.mxu0 0.0
        %1163 = vmatpush1.xpose.msra.mxu0 0.0
        %1164 = vmatprep.subr.mxu0 0.0
        %1165 = vmatpush1.xpose.msra.mxu0 0.0
        %1166 = vmatprep.subr.mxu0 0.0
        %1167 = vmatpush1.xpose.msra.mxu0 0.0
        %1168 = vmatprep.subr.mxu0 0.0
        %1169 = vmatpush1.xpose.msra.mxu0 0.0
        %1170 = vmatprep.subr.mxu0 0.0
        %1171 = vmatpush1.xpose.msra.mxu0 0.0
        %1172 = vmatprep.subr.mxu0 0.0
        %1173 = vmatpush1.xpose.msra.mxu0 0.0
        %1174 = vmatprep.subr.mxu0 0.0
        %1175 = vmatpush1.xpose.msra.mxu0 0.0
        %1176 = vmatprep.subr.mxu0 0.0
        %1177 = vmatpush1.xpose.msra.mxu0 0.0
        %1178 = vmatprep.subr.mxu0 0.0
        %1179 = vmatpush1.xpose.msra.mxu0 0.0
        %1180 = vmatprep.subr.mxu0 0.0
        %1181 = vmatpush1.xpose.msra.mxu0 0.0
        %1182 = vmatprep.subr.mxu0 0.0
        %1183 = vmatpush1.xpose.msra.mxu0 0.0
        %1184 = vmatprep.subr.mxu0 0.0
        %1185 = vmatpush1.xpose.msra.mxu0 0.0
        %1186 = vmatprep.subr.mxu0 0.0
        %1187 = vmatpush1.xpose.msra.mxu0 0.0
        %1188 = vmatprep.subr.mxu0 0.0
        %1189 = vmatpush1.xpose.msra.mxu0 0.0
        %1190 = vmatprep.subr.mxu0 0.0
        %1191 = vmatpush1.xpose.msra.mxu0 0.0
        %1192 = vmatprep.subr.mxu0 0.0
        %1193 = vmatpush1.xpose.msra.mxu0 0.0
        %1194 = vmatprep.subr.mxu0 0.0
        %1195 = vmatpush1.xpose.msra.mxu0 0.0
        %1196 = vmatprep.subr.mxu0 0.0
        %1197 = vmatpush1.xpose.msra.mxu0 0.0
        %1198 = vmatprep.mubr.f32.mxu0 0.0
        %v1199 = vand.u32 %v890, 4294901760
        %v1200 = vsub.f32 %v890, %v1199
        %v1201 = vand.u32 %v1200, 4294901760
        %1202 = vmatmul.mubr.f32.gmra.mrb[0].mxu0 %v1201
        %v1203 = vpop.f32.mrb[0].mxu0
        %v1204 = vadd.f32 %v1129, %v1203
        %v1205 = vpop.f32.mrb[0].mxu0
        %1206 = vdwg.mxu0
        %1207 = vmatprep.subr.mxu0 0.0
        %v1208 = vand.u32 %v893, 4294901760
        %v1209 = vsub.f32 %v893, %v1208
        %v1210 = vand.u32 %v1209, 4294901760
        %1211 = vmatpush1.xpose.msra.mxu0 %v1210
        %1212 = vmatprep.subr.mxu0 0.0
        %v1213 = vand.u32 %v896, 4294901760
        %v1214 = vsub.f32 %v896, %v1213
        %v1215 = vand.u32 %v1214, 4294901760
        %1216 = vmatpush1.xpose.msra.mxu0 %v1215
        %1217 = vmatprep.subr.mxu0 0.0
        %1218 = vmatpush1.xpose.msra.mxu0 0.0
        %1219 = vmatprep.subr.mxu0 0.0
        %1220 = vmatpush1.xpose.msra.mxu0 0.0
        %1221 = vmatprep.subr.mxu0 0.0
        %1222 = vmatpush1.xpose.msra.mxu0 0.0
        %1223 = vmatprep.subr.mxu0 0.0
        %1224 = vmatpush1.xpose.msra.mxu0 0.0
        %1225 = vmatprep.subr.mxu0 0.0
        %1226 = vmatpush1.xpose.msra.mxu0 0.0
        %1227 = vmatprep.subr.mxu0 0.0
        %1228 = vmatpush1.xpose.msra.mxu0 0.0
        %1229 = vmatprep.subr.mxu0 0.0
        %1230 = vmatpush1.xpose.msra.mxu0 0.0
        %1231 = vmatprep.subr.mxu0 0.0
        %1232 = vmatpush1.xpose.msra.mxu0 0.0
        %1233 = vmatprep.subr.mxu0 0.0
        %1234 = vmatpush1.xpose.msra.mxu0 0.0
        %1235 = vmatprep.subr.mxu0 0.0
        %1236 = vmatpush1.xpose.msra.mxu0 0.0
        %1237 = vmatprep.subr.mxu0 0.0
        %1238 = vmatpush1.xpose.msra.mxu0 0.0
        %1239 = vmatprep.subr.mxu0 0.0
        %1240 = vmatpush1.xpose.msra.mxu0 0.0
        %1241 = vmatprep.subr.mxu0 0.0
        %1242 = vmatpush1.xpose.msra.mxu0 0.0
        %1243 = vmatprep.subr.mxu0 0.0
        %1244 = vmatpush1.xpose.msra.mxu0 0.0
        %1245 = vmatprep.subr.mxu0 0.0
        %1246 = vmatpush1.xpose.msra.mxu0 0.0
        %1247 = vmatprep.subr.mxu0 0.0
        %1248 = vmatpush1.xpose.msra.mxu0 0.0
        %1249 = vmatprep.subr.mxu0 0.0
        %1250 = vmatpush1.xpose.msra.mxu0 0.0
        %1251 = vmatprep.subr.mxu0 0.0
        %1252 = vmatpush1.xpose.msra.mxu0 0.0
        %1253 = vmatprep.subr.mxu0 0.0
        %1254 = vmatpush1.xpose.msra.mxu0 0.0
        %1255 = vmatprep.subr.mxu0 0.0
        %1256 = vmatpush1.xpose.msra.mxu0 0.0
        %1257 = vmatprep.subr.mxu0 0.0
        %1258 = vmatpush1.xpose.msra.mxu0 0.0
        %1259 = vmatprep.subr.mxu0 0.0
        %1260 = vmatpush1.xpose.msra.mxu0 0.0
        %1261 = vmatprep.subr.mxu0 0.0
        %1262 = vmatpush1.xpose.msra.mxu0 0.0
        %1263 = vmatprep.subr.mxu0 0.0
        %1264 = vmatpush1.xpose.msra.mxu0 0.0
        %1265 = vmatprep.subr.mxu0 0.0
        %1266 = vmatpush1.xpose.msra.mxu0 0.0
        %1267 = vmatprep.subr.mxu0 0.0
        %1268 = vmatpush1.xpose.msra.mxu0 0.0
        %1269 = vmatprep.subr.mxu0 0.0
        %1270 = vmatpush1.xpose.msra.mxu0 0.0
        %1271 = vmatprep.subr.mxu0 0.0
        %1272 = vmatpush1.xpose.msra.mxu0 0.0
        %1273 = vmatprep.subr.mxu0 0.0
        %1274 = vmatpush1.xpose.msra.mxu0 0.0
        %1275 = vmatprep.subr.mxu0 0.0
        %1276 = vmatpush1.xpose.msra.mxu0 0.0
        %1277 = vmatprep.mubr.f32.mxu0 0.0
        %v1278 = vand.u32 %v890, 4294901760
        %1279 = vmatmul.mubr.f32.gmra.mrb[0].mxu0 %v1278
        %v1280 = vpop.f32.mrb[0].mxu0
        %v1281 = vadd.f32 %v1204, %v1280
        %v1282 = vpop.f32.mrb[0].mxu0
        %1283 = vdwg.mxu0
        %1284 = vmatprep.subr.mxu0 0.0
        %v1285 = vand.u32 %v893, 4294901760
        %1286 = vmatpush1.xpose.msra.mxu0 %v1285
        %1287 = vmatprep.subr.mxu0 0.0
        %v1288 = vand.u32 %v896, 4294901760
        %1289 = vmatpush1.xpose.msra.mxu0 %v1288
        %1290 = vmatprep.subr.mxu0 0.0
        %1291 = vmatpush1.xpose.msra.mxu0 0.0
        %1292 = vmatprep.subr.mxu0 0.0
        %1293 = vmatpush1.xpose.msra.mxu0 0.0
        %1294 = vmatprep.subr.mxu0 0.0
        %1295 = vmatpush1.xpose.msra.mxu0 0.0
        %1296 = vmatprep.subr.mxu0 0.0
        %1297 = vmatpush1.xpose.msra.mxu0 0.0
        %1298 = vmatprep.subr.mxu0 0.0
        %1299 = vmatpush1.xpose.msra.mxu0 0.0
        %1300 = vmatprep.subr.mxu0 0.0
        %1301 = vmatpush1.xpose.msra.mxu0 0.0
        %1302 = vmatprep.subr.mxu0 0.0
        %1303 = vmatpush1.xpose.msra.mxu0 0.0
        %1304 = vmatprep.subr.mxu0 0.0
        %1305 = vmatpush1.xpose.msra.mxu0 0.0
        %1306 = vmatprep.subr.mxu0 0.0
        %1307 = vmatpush1.xpose.msra.mxu0 0.0
        %1308 = vmatprep.subr.mxu0 0.0
        %1309 = vmatpush1.xpose.msra.mxu0 0.0
        %1310 = vmatprep.subr.mxu0 0.0
        %1311 = vmatpush1.xpose.msra.mxu0 0.0
        %1312 = vmatprep.subr.mxu0 0.0
        %1313 = vmatpush1.xpose.msra.mxu0 0.0
        %1314 = vmatprep.subr.mxu0 0.0
        %1315 = vmatpush1.xpose.msra.mxu0 0.0
        %1316 = vmatprep.subr.mxu0 0.0
        %1317 = vmatpush1.xpose.msra.mxu0 0.0
        %1318 = vmatprep.subr.mxu0 0.0
        %1319 = vmatpush1.xpose.msra.mxu0 0.0
        %1320 = vmatprep.subr.mxu0 0.0
        %1321 = vmatpush1.xpose.msra.mxu0 0.0
        %1322 = vmatprep.subr.mxu0 0.0
        %1323 = vmatpush1.xpose.msra.mxu0 0.0
        %1324 = vmatprep.subr.mxu0 0.0
        %1325 = vmatpush1.xpose.msra.mxu0 0.0
        %1326 = vmatprep.subr.mxu0 0.0
        %1327 = vmatpush1.xpose.msra.mxu0 0.0
        %1328 = vmatprep.subr.mxu0 0.0
        %1329 = vmatpush1.xpose.msra.mxu0 0.0
        %1330 = vmatprep.subr.mxu0 0.0
        %1331 = vmatpush1.xpose.msra.mxu0 0.0
        %1332 = vmatprep.subr.mxu0 0.0
        %1333 = vmatpush1.xpose.msra.mxu0 0.0
        %1334 = vmatprep.subr.mxu0 0.0
        %1335 = vmatpush1.xpose.msra.mxu0 0.0
        %1336 = vmatprep.subr.mxu0 0.0
        %1337 = vmatpush1.xpose.msra.mxu0 0.0
        %1338 = vmatprep.subr.mxu0 0.0
        %1339 = vmatpush1.xpose.msra.mxu0 0.0
        %1340 = vmatprep.subr.mxu0 0.0
        %1341 = vmatpush1.xpose.msra.mxu0 0.0
        %1342 = vmatprep.subr.mxu0 0.0
        %1343 = vmatpush1.xpose.msra.mxu0 0.0
        %1344 = vmatprep.subr.mxu0 0.0
        %1345 = vmatpush1.xpose.msra.mxu0 0.0
        %1346 = vmatprep.subr.mxu0 0.0
        %1347 = vmatpush1.xpose.msra.mxu0 0.0
        %1348 = vmatprep.subr.mxu0 0.0
        %1349 = vmatpush1.xpose.msra.mxu0 0.0
        %1350 = vmatprep.mubr.f32.mxu0 0.0
        %v1351 = vand.u32 %v890, 4294901760
        %1352 = vmatmul.mubr.f32.gmra.mrb[0].mxu0 %v1351
        %v1353 = vpop.f32.mrb[0].mxu0
        %v1354 = vadd.f32 %v1281, %v1353
        %v1355 = vpop.f32.mrb[0].mxu0
        %1356 = vdwg.mxu0
        %vm1357 = vcmask 80896
        %1358 = vst.msk [vmem:[%s294] sm:$0xff] %vm1357, %v1354
        %s1359 = sand.u32 %s160, 1
        %s1360 = scalar_lea.sflag [#allocation4], %s1359
        %s1361 = sand.u32 %s160, 1
        %s1362 = smul.addr %s1361, 8
        %s1363 = scalar_lea.vmem [#allocation5], %s1362
        // Predicated region
        $region45: #{tpu_custom_call.1} parent=39 // pred_check
          %p1364 = pneg %p170
        $region46: #{tpu_custom_call.1} parent=39 // pred_check_branch
          %1366 = sbr.rel (%p1364) target = $region48
        $region47: #{tpu_custom_call.1} parent=39 // pred_region
          %s1368 = ssub.s32 128, 128
          %1369 = vsyncadd %s1360, %s1368
          %s1370 = smul.addr %s22, 128
          %s1371 = scalar_lea.hbm %s5, %s1370
          %s1373 = sshll.u32 %s1363, 4
          %s1374 = int_to_ptr.vmem [resolvable:$true] %s1373
          %1376 = dma.vmem_to_hbm [thread:$0]  %s1374, 128, %s1371, %s1360
        $region48: #{tpu_custom_call.1} parent=39 // pred_fallthru
          _
      $region40: #{tpu_custom_call.1} parent=5 // pred_fallthru
        _
      %p1377 = scmp.le.s32.totalorder 2, %s17
      // Predicated region
      $region49: #{tpu_custom_call.1} parent=5 // pred_check
        %p1378 = pneg %p1377
      $region50: #{tpu_custom_call.1} parent=5 // pred_check_branch
        %1380 = sbr.rel (%p1378) target = $region52
      $region51: #{tpu_custom_call.1} parent=5 // pred_region
        %s1381 = ssub.s32 %s17, 2
        // Predicated region
        $region53: #{tpu_custom_call.1} parent=51 // pred_check
          %p1382 = pneg %p176
        $region54: #{tpu_custom_call.1} parent=51 // pred_check_branch
          %1384 = sbr.rel (%p1382) target = $region56
        $region55: #{tpu_custom_call.1} parent=51 // pred_region
          %s1385 = sand.u32 %s161, 1
          %s1386 = scalar_lea.sflag [#allocation4], %s1385
          %s1387 = sand.u32 %s161, 1
          %s1388 = smul.addr %s1387, 8
          %s1389 = scalar_lea.vmem [#allocation5], %s1388
          %1390 = dma.done %s1386, 128
        $region56: #{tpu_custom_call.1} parent=51 // pred_fallthru
          _
      $region52: #{tpu_custom_call.1} parent=5 // pred_fallthru
        _
    $region6: #{tpu_custom_call.1} parent=1 // loop_footer
      %s21 = sadd.s32 1, %s17
    $region7: #{tpu_custom_call.1} parent=1 // loop_footer_branch
      %16 = sbr.rel target = $region3
    $region8: #{tpu_custom_call.1} parent=1 // loop_exit
      _
    %1391 = vsyncpa [#allocation3], 1
    %s1392 = scalar_lea.sflag [#allocation3], 1
    %1393 = vsyncpa %s1392, 1
    %1394 = vsyncpa [#allocation4], 1
    %s1395 = scalar_lea.sflag [#allocation4], 1
    %1396 = vsyncpa %s1395, 1

</llo_original>
